<compile_context>
chip_gen: v5e
topology: v5e:2x2
jax: 0.10.0
libtpu: 0.0.40
codegen_flags: <defaults>
</compile_context>

<pallas_src>
import functools

import jax
import jax.numpy as jnp
from jax.experimental import pallas as pl
from jax.experimental.pallas import tpu as pltpu


def _patch_embed_kernel(p_ref, w_ref, pos_ref, o_ref, *, bb):
    # p_ref   : (Bb, N+1, K)  bf16 — row 0 of each image is a zero row (cls slot)
    # w_ref   : (K, Eb)       bf16 — resident projection weight (transposed conv w)
    # pos_ref : (N+1, Eb)     f32  — row 0 = cls_token + positions[0],
    #                                rows 1.. = positions[1:] + conv bias
    # o_ref   : (Bb, N+1, Eb) out_dtype
    w = w_ref[...]
    pos = pos_ref[...]
    for bi in range(bb):                       # small static unroll (Bb <= 8)
        acc = jnp.dot(p_ref[bi], w, preferred_element_type=jnp.float32)
        o_ref[bi] = (acc + pos).astype(o_ref.dtype)


def patch_embedding_forward(x, conv_w, conv_b, cls_token, positions, patch_size,
                            *, out_dtype=jnp.bfloat16, num_e_blocks=1,
                            max_images_per_step=8):
    """x: (B, C, H, W) NCHW; same semantics as the PyTorch PatchEmbedding."""
    B, C, H, W = x.shape
    E = conv_w.shape[0]
    P = patch_size
    assert H % P == 0 and W % P == 0
    Hb, Wb = H // P, W // P
    N = Hb * Wb
    Np1 = N + 1
    K = C * P * P

    assert E % num_e_blocks == 0
    Eb = E // num_e_blocks
    if num_e_blocks > 1:
        assert Eb % 128 == 0, "E-split blocks must stay lane-dense"

    # ---- operand prep (single XLA copy pass; see allow_input_fusion below) ----
    # Flatten order (c, ph, pw) matches Conv2d weight layout.
    patches = x.reshape(B, C, Hb, P, Wb, P)
    patches = patches.transpose(0, 2, 4, 1, 3, 5).reshape(B, N, K)
    # Prepend one zero row per image: the cls row comes out of the GEMM as
    # 0 @ W + pos_ext[0], so every output slab is written fully aligned.
    patches_ext = jnp.pad(patches, ((0, 0), (1, 0), (0, 0))).astype(jnp.bfloat16)

    w_t = conv_w.reshape(E, K).T.astype(jnp.bfloat16)            # (K, E) bf16
    pos_ext = jnp.concatenate(
        [cls_token.reshape(1, E) + positions[0:1],                # cls row
         positions[1:] + conv_b[None, :]],                        # bias folded in
        axis=0).astype(jnp.float32)                               # (N+1, E) f32

    # ---- pick images-per-step from a portable VMEM budget ---------------------
    out_bytes = jnp.dtype(out_dtype).itemsize

    def footprint(bb):
        stream = 2 * bb * Np1 * (K * 2 + Eb * out_bytes)      # double-buffered blocks
        resident = 2 * Eb * (K * 2 + Np1 * 4)                 # weight + pos table
        return stream + resident

    budget = 24 << 20                        # safe on v5e/v6e/v7x scoped limits
    bb = 1
    for cand in range(min(B, max_images_per_step), 0, -1):
        if B % cand == 0 and footprint(cand) <= budget:
            bb = cand
            break
    # TODO(synk): if footprint(1) > budget (huge N*K), add a K/N grid axis with
    # an f32 VMEM accumulator scratch instead of one resident K-wide block.
    vmem_limit = int(min(max(footprint(bb) + (8 << 20), 32 << 20), 56 << 20))

    kernel = functools.partial(_patch_embed_kernel, bb=bb)

    out = pl.pallas_call(
        kernel,
        out_shape=jax.ShapeDtypeStruct((B, Np1, E), out_dtype),
        grid_spec=pltpu.PrefetchScalarGridSpec(
            num_scalar_prefetch=0,
            # E-split axis first (slow) so resident blocks are re-DMA'd at most
            # num_e_blocks times; batch-block axis second (fast).
            grid=(num_e_blocks, B // bb),
            in_specs=[
                # Bb images' extended patch matrices for this step.
                pl.BlockSpec((bb, Np1, K), lambda e, b: (b, 0, 0)),
                # TODO(synk): pipeline_mode=pl.Buffered(1) on the two resident
                # inputs below would halve their VMEM once confirmed supported.
                pl.BlockSpec((K, Eb), lambda e, b: (0, e)),       # weight, resident
                pl.BlockSpec((Np1, Eb), lambda e, b: (0, e)),     # pos(+bias,+cls)
            ],
            out_specs=pl.BlockSpec((bb, Np1, Eb), lambda e, b: (b, 0, e)),
        ),
        compiler_params=pltpu.CompilerParams(
            dimension_semantics=("parallel", "parallel"),
            # TODO(synk): verify in xprof that the transpose+pad+bf16-cast
            # producer actually fuses into the Pallas input DMA; if not (or the
            # fused gather is descriptor-bound), feed x directly over (C, P, W)
            # slabs and rearrange in-kernel (XLU slack in a mem-bound kernel).
            allow_input_fusion=[True, False, False],
            vmem_limit_bytes=vmem_limit,
        ),
    )(patches_ext, w_t, pos_ext)
    return out


if __name__ == "__main__":
    # Small, module-consistent shapes.
    in_channels, patch_size, emb_size, img_size = 4, 4, 32, 16
    B = 2
    Hb = Wb = img_size // patch_size
    N = Hb * Wb                                           # 16 patches
    K = in_channels * patch_size * patch_size             # 64

    key = jax.random.PRNGKey(0)
    kx, kw, kb, kc, kp = jax.random.split(key, 5)

    x = jax.random.normal(kx, (B, in_channels, img_size, img_size), jnp.float32)
    conv_w = jax.random.normal(kw, (emb_size, in_channels, patch_size, patch_size),
                               jnp.float32) * 0.02
    conv_b = jax.random.normal(kb, (emb_size,), jnp.float32) * 0.02
    cls_token = jax.random.normal(kc, (1, 1, emb_size), jnp.float32)
    positions = jax.random.normal(kp, (N + 1, emb_size), jnp.float32)

    out = patch_embedding_forward(x, conv_w, conv_b, cls_token, positions, patch_size)
    out = jax.block_until_ready(out)

    # Reference (plain JAX, same math as the PyTorch module); operands rounded
    # to bf16 to match MXU input precision, compared in f32 (output is bf16).
    patches_ref = x.reshape(B, in_channels, Hb, patch_size, Wb, patch_size)
    patches_ref = patches_ref.transpose(0, 2, 4, 1, 3, 5).reshape(B, N, K)
    p_bf = patches_ref.astype(jnp.bfloat16).astype(jnp.float32)
    w_bf = conv_w.reshape(emb_size, K).astype(jnp.bfloat16).astype(jnp.float32)
    proj_ref = jnp.einsum("bnk,ek->bne", p_bf, w_bf,
                          precision=jax.lax.Precision.HIGHEST) + conv_b
    cls_ref = jnp.broadcast_to(cls_token.reshape(1, 1, emb_size), (B, 1, emb_size))
    ref = jnp.concatenate([cls_ref, proj_ref], axis=1) + positions[None]

    assert out.shape == (B, N + 1, emb_size)
    assert out.dtype == jnp.bfloat16
    assert jnp.allclose(out.astype(jnp.float32), ref, atol=3e-2, rtol=3e-2)
    print("KERNEL_OK")
</pallas_src>

<mosaic_0001>
module attributes {stable_mosaic.version = 11 : i64} {
  func.func @_patch_embed_kernel(%arg0: i32, %arg1: i32, %arg2: memref<2x17x64xbf16, #tpu.memory_space<vmem>>, %arg3: memref<64x32xbf16, #tpu.memory_space<vmem>>, %arg4: memref<17x32xf32, #tpu.memory_space<vmem>>, %arg5: memref<2x17x32xbf16, #tpu.memory_space<vmem>>) attributes {dimension_semantics = [#tpu.dimension_semantics<parallel>, #tpu.dimension_semantics<parallel>], iteration_bounds = array<i64: 1, 1>, scalar_prefetch = 0 : i64, scratch_operands = 0 : i64, tpu.core_type = #tpu.core_type<tc>, window_params = [{transform_indices = @transform_0, window_bounds = array<i64: 2, 17, 64>}, {transform_indices = @transform_1, window_bounds = array<i64: 64, 32>}, {transform_indices = @transform_2, window_bounds = array<i64: 17, 32>}, {transform_indices = @transform_3, window_bounds = array<i64: 2, 17, 32>}]} {
    %c0 = arith.constant 0 : index
    %c0_0 = arith.constant 0 : index
    %0 = vector.load %arg3[%c0, %c0_0] : memref<64x32xbf16, #tpu.memory_space<vmem>>, vector<64x32xbf16>
    %c0_1 = arith.constant 0 : index
    %c0_2 = arith.constant 0 : index
    %1 = vector.load %arg4[%c0_1, %c0_2] : memref<17x32xf32, #tpu.memory_space<vmem>>, vector<17x32xf32>
    %c0_3 = arith.constant 0 : index
    %c0_4 = arith.constant 0 : index
    %c0_5 = arith.constant 0 : index
    %2 = vector.load %arg2[%c0_3, %c0_4, %c0_5] : memref<2x17x64xbf16, #tpu.memory_space<vmem>>, vector<1x17x64xbf16>
    %3 = vector.shape_cast %2 : vector<1x17x64xbf16> to vector<17x64xbf16>
    %cst = arith.constant dense<0.000000e+00> : vector<17x32xf32>
    %4 = tpu.matmul %3, %0, %cst {dimension_numbers = #tpu.dot_dimension_numbers<[1], [0], [0], [1], [0, 0, 1, 1], [], []>} : vector<17x64xbf16>, vector<64x32xbf16>, vector<17x32xf32> -> vector<17x32xf32>
    %5 = arith.addf %4, %1 : vector<17x32xf32>
    %6 = arith.truncf %5 : vector<17x32xf32> to vector<17x32xbf16>
    %c0_6 = arith.constant 0 : index
    %c0_7 = arith.constant 0 : index
    %c0_8 = arith.constant 0 : index
    %7 = vector.load %arg5[%c0_6, %c0_7, %c0_8] : memref<2x17x32xbf16, #tpu.memory_space<vmem>>, vector<1x17x32xbf16>
    %8 = vector.shape_cast %7 : vector<1x17x32xbf16> to vector<17x32xbf16>
    %9 = vector.shape_cast %6 : vector<17x32xbf16> to vector<1x17x32xbf16>
    tpu.vector_store %arg5[%c0_6, %c0_7, %c0_8], %9 {strides = array<i32>} : memref<2x17x32xbf16, #tpu.memory_space<vmem>>, vector<1x17x32xbf16>,
    %c1 = arith.constant 1 : index
    %c0_9 = arith.constant 0 : index
    %c0_10 = arith.constant 0 : index
    %10 = vector.load %arg2[%c1, %c0_9, %c0_10] : memref<2x17x64xbf16, #tpu.memory_space<vmem>>, vector<1x17x64xbf16>
    %11 = vector.shape_cast %10 : vector<1x17x64xbf16> to vector<17x64xbf16>
    %cst_11 = arith.constant dense<0.000000e+00> : vector<17x32xf32>
    %12 = tpu.matmul %11, %0, %cst_11 {dimension_numbers = #tpu.dot_dimension_numbers<[1], [0], [0], [1], [0, 0, 1, 1], [], []>} : vector<17x64xbf16>, vector<64x32xbf16>, vector<17x32xf32> -> vector<17x32xf32>
    %13 = arith.addf %12, %1 : vector<17x32xf32>
    %14 = arith.truncf %13 : vector<17x32xf32> to vector<17x32xbf16>
    %c1_12 = arith.constant 1 : index
    %c0_13 = arith.constant 0 : index
    %c0_14 = arith.constant 0 : index
    %15 = vector.load %arg5[%c1_12, %c0_13, %c0_14] : memref<2x17x32xbf16, #tpu.memory_space<vmem>>, vector<1x17x32xbf16>
    %16 = vector.shape_cast %15 : vector<1x17x32xbf16> to vector<17x32xbf16>
    %17 = vector.shape_cast %14 : vector<17x32xbf16> to vector<1x17x32xbf16>
    tpu.vector_store %arg5[%c1_12, %c0_13, %c0_14], %17 {strides = array<i32>} : memref<2x17x32xbf16, #tpu.memory_space<vmem>>, vector<1x17x32xbf16>,
    return
  }
  func.func @transform_0(%arg0: i32, %arg1: i32) -> (i32, i32, i32) {
    %c0_i32 = arith.constant 0 : i32
    %c0_i32_0 = arith.constant 0 : i32
    %c0_i32_1 = arith.constant 0 : i32
    return %arg1, %c0_i32, %c0_i32_0 : i32, i32, i32
  }
  func.func @transform_1(%arg0: i32, %arg1: i32) -> (i32, i32) {
    %c0_i32 = arith.constant 0 : i32
    %c0_i32_0 = arith.constant 0 : i32
    return %c0_i32, %arg0 : i32, i32
  }
  func.func @transform_2(%arg0: i32, %arg1: i32) -> (i32, i32) {
    %c0_i32 = arith.constant 0 : i32
    %c0_i32_0 = arith.constant 0 : i32
    return %c0_i32, %arg0 : i32, i32
  }
  func.func @transform_3(%arg0: i32, %arg1: i32) -> (i32, i32, i32) {
    %c0_i32 = arith.constant 0 : i32
    %c0_i32_0 = arith.constant 0 : i32
    return %arg1, %c0_i32, %arg0 : i32, i32, i32
  }
}

</mosaic_0001>

<llo_original>
// kernel: tpu_custom_call.1
$region0: #{tpu_custom_call.1}
  #allocation0 [shape = 'u32[]', space=smem, size = 0x4, offset = 0x4, fixed_abs, tag = 'smem constant byte address 0x4 - core index']
  #allocation1 [shape = 'u32[72,128]{1,0:T(1,128)}', space=vmem, size = 0x9000, scoped, tag = 'internal scratch']
  %s0 = inlined_call_operand.vmem [shape: bf16[2,17,64], index: 0, kind: input, shape index: {}]
  %s1 = inlined_call_operand.vmem [shape: bf16[64,32], index: 1, kind: input, shape index: {}]
  %s2 = inlined_call_operand.vmem [shape: f32[17,32], index: 2, kind: input, shape index: {}]
  %s3 = inlined_call_operand.vmem [shape: bf16[2,17,32], index: 3, kind: output, shape index: {}]
  %s4 = sld [smem:[#allocation0]]
  $region22: #{tpu_custom_call.1} parent=0
    _
  %s6 = ssub.s32 1, %s4
  %s7 = scalar_select 0, %s6, %s4
  // Predicated region
  $region2: #{tpu_custom_call.1} parent=0 // pred_check
    _
  $region3: #{tpu_custom_call.1} parent=0 // pred_check_branch
    %9 = sbr.rel (0) target = $region5
  $region4: #{tpu_custom_call.1} parent=0 // pred_region
    _
  $region5: #{tpu_custom_call.1} parent=0 // pred_fallthru
    _
  // Predicated region
  $region6: #{tpu_custom_call.1} parent=0 // pred_check
    _
  $region7: #{tpu_custom_call.1} parent=0 // pred_check_branch
    %11 = sbr.rel (0) target = $region9
  $region8: #{tpu_custom_call.1} parent=0 // pred_region
    _
  $region9: #{tpu_custom_call.1} parent=0 // pred_fallthru
    _
  // Predicated region
  $region10: #{tpu_custom_call.1} parent=0 // pred_check
    _
  $region11: #{tpu_custom_call.1} parent=0 // pred_check_branch
    %13 = sbr.rel (0) target = $region13
  $region12: #{tpu_custom_call.1} parent=0 // pred_region
    _
  $region13: #{tpu_custom_call.1} parent=0 // pred_fallthru
    _
  %v15 = vld [vmem:[%s1] sm:$0xf]
  %v16 = vld [vmem:[%s1 + $0x4] sm:$0xf]
  %v17 = vld [vmem:[%s1 + $0x8] sm:$0xf]
  %v18 = vld [vmem:[%s1 + $0xc] sm:$0xf]
  %v19 = vld [vmem:[%s1 + $0x10] sm:$0xf]
  %v20 = vld [vmem:[%s1 + $0x14] sm:$0xf]
  %v21 = vld [vmem:[%s1 + $0x18] sm:$0xf]
  %v22 = vld [vmem:[%s1 + $0x1c] sm:$0xf]
  %v23 = vld [vmem:[%s2] sm:$0xff]
  %v24 = vld [vmem:[%s2 + $0x8] sm:$0xff]
  %v25 = vld [vmem:[%s2 + $0x10] sm:$0x1]
  %v26 = vld [vmem:[%s0] sm:$0xf]
  %v27 = vld [vmem:[%s0 + $0x4] sm:$0xf]
  %v28 = vld [vmem:[%s0 + $0x8] sm:$0x1]
  %v32 = vunpack.c.l.b16 %v26
  %v33 = vunpack.c.l.b16 %v27
  %v34 = vunpack.c.l.b16 %v28
  %v35 = vpack.c.b16 %v33, %v32
  %v36 = vpack.c.b16 %v34, %v34
  %v45 = vunpack.c.l.b16 %v15
  %v46 = vunpack.c.l.b16 %v16
  %v47 = vunpack.c.l.b16 %v17
  %v48 = vunpack.c.l.b16 %v18
  %v49 = vunpack.c.l.b16 %v19
  %v50 = vunpack.c.l.b16 %v20
  %v51 = vunpack.c.l.b16 %v21
  %v52 = vunpack.c.l.b16 %v22
  %v53 = vpack.c.b16 %v46, %v45
  %v54 = vpack.c.b16 %v48, %v47
  %v55 = vpack.c.b16 %v50, %v49
  %v56 = vpack.c.b16 %v52, %v51
  %vm61 = vcmask 523264
  %v63 = vsel %vm61, %v35, 0
  %v66 = vsel %vm61, %v36, 0
  %68 = vmatpush.bf16.msra.mxu0 0
  %69 = vmatpush.bf16.msra.mxu0 0
  %70 = vmatpush.bf16.msra.mxu0 0
  %71 = vmatpush.bf16.msra.mxu0 0
  %72 = vmatpush.bf16.msra.mxu0 %v56
  %73 = vmatpush.bf16.msra.mxu0 %v55
  %74 = vmatpush.bf16.msra.mxu0 %v54
  %75 = vmatpush.bf16.msra.mxu0 %v53
  %76 = vmatmul.bf16.gmra.mxu0 %v63
  %v77 = vpop.f32.mrf.mxu0
  %v78 = vadd.f32 %v23, %v77
  %v79 = vpop.f32.mrf.mxu0
  %v80 = vadd.f32 %v24, %v79
  %81 = vmatmul.bf16.gmra.mxu0 %v66
  %v82 = vpop.f32.mrf.mxu0
  %v83 = vadd.f32 %v25, %v82
  %v84 = vpop.f32.mrf.mxu0
  %85 = vdwg.mxu0
  %v86 = vpack.c.bf16 %v78, %v78
  %v87 = vpack.c.bf16 %v80, %v80
  %v88 = vpack.c.bf16 %v83, %v83
  %vm89 = vcmask 257024
  %90 = vst.msk [vmem:[%s3] sm:$0xf] %vm89, %v86
  %91 = vst.msk [vmem:[%s3 + $0x4] sm:$0xf] %vm89, %v87
  %vm92 = vcmask 253952
  %vm93 = vsmask.f32 256
  %vm94 = vmand %vm92, %vm93
  %v95 = vld [vmem:[%s3 + $0x8] sm:$0x1]
  %v96 = vsel %vm94, %v88, %v95
  %97 = vst [vmem:[%s3 + $0x8] sm:$0x1] %v96
  %s98 = scalar_lea.vmem %s0, 12
  %v99 = vld [vmem:[%s98] sm:$0xf]
  %v100 = vld [vmem:[%s98 + $0x4] sm:$0xf]
  %v101 = vld [vmem:[%s98 + $0x8] sm:$0x1]
  %v105 = vunpack.c.l.b16 %v99
  %v106 = vunpack.c.l.b16 %v100
  %v107 = vunpack.c.l.b16 %v101
  %v108 = vpack.c.b16 %v106, %v105
  %v109 = vpack.c.b16 %v107, %v107
  %v111 = vsel %vm61, %v108, 0
  %v114 = vsel %vm61, %v109, 0
  %116 = vmatpush.bf16.msra.mxu0 0
  %117 = vmatpush.bf16.msra.mxu0 0
  %118 = vmatpush.bf16.msra.mxu0 0
  %119 = vmatpush.bf16.msra.mxu0 0
  %120 = vmatpush.bf16.msra.mxu0 %v56
  %121 = vmatpush.bf16.msra.mxu0 %v55
  %122 = vmatpush.bf16.msra.mxu0 %v54
  %123 = vmatpush.bf16.msra.mxu0 %v53
  %124 = vmatmul.bf16.gmra.mxu0 %v111
  %v125 = vpop.f32.mrf.mxu0
  %v126 = vadd.f32 %v23, %v125
  %v127 = vpop.f32.mrf.mxu0
  %v128 = vadd.f32 %v24, %v127
  %129 = vmatmul.bf16.gmra.mxu0 %v114
  %v130 = vpop.f32.mrf.mxu0
  %v131 = vadd.f32 %v25, %v130
  %v132 = vpop.f32.mrf.mxu0
  %133 = vdwg.mxu0
  %v134 = vpack.c.bf16 %v126, %v126
  %v135 = vpack.c.bf16 %v128, %v128
  %v136 = vpack.c.bf16 %v131, %v131
  %s137 = scalar_lea.vmem %s3, 12
  %138 = vst.msk [vmem:[%s137] sm:$0xf] %vm89, %v134
  %139 = vst.msk [vmem:[%s137 + $0x4] sm:$0xf] %vm89, %v135
  %v140 = vld [vmem:[%s137 + $0x8] sm:$0x1]
  %v141 = vsel %vm94, %v136, %v140
  %142 = vst [vmem:[%s137 + $0x8] sm:$0x1] %v141
  // Predicated region
  $region14: #{tpu_custom_call.1} parent=0 // pred_check
    _
  $region15: #{tpu_custom_call.1} parent=0 // pred_check_branch
    %144 = sbr.rel (0) target = $region17
  $region16: #{tpu_custom_call.1} parent=0 // pred_region
    _
  $region17: #{tpu_custom_call.1} parent=0 // pred_fallthru
    _
  // Predicated region
  $region18: #{tpu_custom_call.1} parent=0 // pred_check
    _
  $region19: #{tpu_custom_call.1} parent=0 // pred_check_branch
    %146 = sbr.rel (0) target = $region21
  $region20: #{tpu_custom_call.1} parent=0 // pred_region
    _
  $region21: #{tpu_custom_call.1} parent=0 // pred_fallthru
    _

</llo_original>
